<compile_context>
chip_gen: v6e
topology: v6e:2x2x1
jax: 0.10.0
libtpu: 0.0.40
codegen_flags: <defaults>
</compile_context>

<pallas_src>
import math

import jax
import jax.numpy as jnp
from jax.experimental import pallas as pl
from jax.experimental.pallas import tpu as pltpu


def _round_up(n: int, m: int) -> int:
    return ((n + m - 1) // m) * m


def _fourier_kernel(x_ref, w_ref, phase_ref, out_ref):
    # x_ref:     (tm2, 2*D)   two original input rows packed per kernel row
    # w_ref:     (2*D, 4*F)   block weight [[w, w, 0, 0], [0, 0, w, w]], w = 2*pi*B.T
    # phase_ref: (1, 4*F)     0 on sin lanes, pi/2 on cos lanes
    # out_ref:   (tm2, 4*F)   [sin(p_e) | cos(p_e) | sin(p_o) | cos(p_o)] per row pair
    #
    # MXU handles the tiny-K contraction (vex slot is otherwise idle); the VPU
    # then does a single full-128-lane sin (cos folded in via the phase offset).
    p = jnp.dot(
        x_ref[...],
        w_ref[...],
        preferred_element_type=jnp.float32,
        precision=jax.lax.Precision.HIGHEST,  # keep the f32 projection exact
    )
    out_ref[...] = jnp.sin(p + phase_ref[...]).astype(out_ref.dtype)


def init_fourier_params(B: jax.Array):
    """Fold 2*pi, the transpose, the row-pair packing and the sin/cos phase
    offset into two small kernel constants (done once at module init).

    B: (num_features, input_dim) fixed, non-trainable projection.
    Returns:
      w_big: (2*input_dim, 4*num_features) float32
      phase: (1, 4*num_features) float32
    """
    F, D = B.shape
    w = (2.0 * jnp.pi) * B.T.astype(jnp.float32)            # (D, F)
    z = jnp.zeros_like(w)
    w_big = jnp.block([[w, w, z, z], [z, z, w, w]])          # (2D, 4F)
    half_pi = jnp.full((1, F), jnp.pi / 2, dtype=jnp.float32)
    zero = jnp.zeros((1, F), dtype=jnp.float32)
    phase = jnp.concatenate([zero, half_pi, zero, half_pi], axis=-1)  # (1, 4F)
    return w_big, phase


def fourier_features(x, w_big, phase, *, tm2: int = 4096, out_dtype=jnp.float32):
    """Pallas equivalent of FourierFeatures.forward.

    x:      (..., input_dim) float input
    w_big:  (2*input_dim, 4*num_features) from init_fourier_params
    phase:  (1, 4*num_features)           from init_fourier_params
    returns (..., 2*num_features) in out_dtype (default float32).
    """
    *lead, D = x.shape
    twoD, fourF = w_big.shape
    assert twoD == 2 * D, (
        "w_big must be the packed (2*input_dim, 4*num_features) weight produced "
        "by init_fourier_params (it already folds the 2*pi factor and transpose)"
    )
    assert phase.shape == (1, fourF)
    F = fourF // 4
    M = math.prod(lead) if lead else 1

    x_flat = x.reshape(M, D).astype(jnp.float32)

    # Pack two rows per kernel row -> 4F-lane (=128 for F=32) output blocks.
    M_even = M + (M & 1)
    if M_even != M:
        # TODO(synk): odd flattened row count pays one zero-pad row (copy of x)
        # and a final output slice; even M takes the copy-free reshape path.
        x_flat = jnp.pad(x_flat, ((0, 1), (0, 0)))
    M2 = M_even // 2
    x_packed = x_flat.reshape(M2, 2 * D)  # byte-identical row-major reshape

    # Large tiles amortize per-grid-step overhead; cap at the available rows,
    # and keep >= 2 grid steps when there is enough work so v7x can shard the
    # "parallel" axis across its 2 TensorCores.
    tm2 = min(tm2, _round_up(M2, 8))
    if _round_up(M2, 8) >= 16:
        tm2 = min(tm2, max(8, _round_up(pl.cdiv(M2, 2), 8)))
    grid = (pl.cdiv(M2, tm2),)  # ragged last block handled by Pallas masking

    out_packed = pl.pallas_call(
        _fourier_kernel,
        out_shape=jax.ShapeDtypeStruct((M2, 4 * F), out_dtype),
        grid=grid,
        in_specs=[
            pl.BlockSpec((tm2, 2 * D), lambda i: (i, 0)),    # row-pair tile of x
            pl.BlockSpec((2 * D, 4 * F), lambda i: (0, 0)),  # resident weights (~4 KiB)
            pl.BlockSpec((1, 4 * F), lambda i: (0, 0)),      # resident phase (~512 B)
        ],
        out_specs=pl.BlockSpec((tm2, 4 * F), lambda i: (i, 0)),
        compiler_params=pltpu.CompilerParams(
            dimension_semantics=("parallel",),
        ),
    )(x_packed, w_big, phase)

    out = out_packed.reshape(M_even, 2 * F)
    if M_even != M:
        out = out[:M]
    return out.reshape(*lead, 2 * F)


if __name__ == "__main__":
    input_dim = 4
    num_features = 32
    scale = 10.0

    # Fixed, non-trainable projection (deterministic analogue of
    # torch.manual_seed(17); torch.randn(num_features, input_dim) * scale).
    # TODO(synk): torch's RNG stream is not reproduced bit-for-bit in JAX.
    B = scale * jax.random.normal(
        jax.random.PRNGKey(17), (num_features, input_dim), dtype=jnp.float32
    )
    w_big, phase = init_fourier_params(B)

    def reference(xx):
        proj = 2.0 * jnp.pi * jnp.matmul(xx, B.T)
        return jnp.concatenate([jnp.sin(proj), jnp.cos(proj)], axis=-1)

    # 1) Small even-M case: batch=2, seq=8, input_dim=4 -> output (2, 8, 64).
    x = jax.random.normal(
        jax.random.PRNGKey(0), (2, 8, input_dim), dtype=jnp.float32
    )
    out = jax.block_until_ready(fourier_features(x, w_big, phase))
    ref = reference(x)
    assert out.shape == ref.shape == (2, 8, 2 * num_features)
    assert jnp.allclose(out, ref, atol=1e-3, rtol=1e-3)

    # 2) Odd flattened row count: exercises the pad-one-row + slice path and a
    #    2-step grid with a ragged last block.
    x2 = jax.random.normal(
        jax.random.PRNGKey(1), (3, 37, input_dim), dtype=jnp.float32
    )
    out2 = jax.block_until_ready(fourier_features(x2, w_big, phase))
    ref2 = reference(x2)
    assert out2.shape == ref2.shape == (3, 37, 2 * num_features)
    assert jnp.allclose(out2, ref2, atol=1e-3, rtol=1e-3)

    # 3) Even, non-tile-aligned row count: copy-free path, 2 grid steps,
    #    ragged last block handled by Pallas masking.
    x3 = jax.random.normal(
        jax.random.PRNGKey(2), (2, 1041, input_dim), dtype=jnp.float32
    )
    out3 = jax.block_until_ready(fourier_features(x3, w_big, phase))
    ref3 = reference(x3)
    assert out3.shape == ref3.shape == (2, 1041, 2 * num_features)
    assert jnp.allclose(out3, ref3, atol=1e-3, rtol=1e-3)

    # 4) Optional bf16 output path (compute stays f32 in-kernel).
    out_bf16 = jax.block_until_ready(
        fourier_features(x, w_big, phase, out_dtype=jnp.bfloat16)
    )
    assert out_bf16.dtype == jnp.bfloat16
    assert jnp.allclose(out_bf16.astype(jnp.float32), ref, atol=2e-2, rtol=2e-2)

    print("KERNEL_OK")
</pallas_src>

<mosaic_0001>
module attributes {stable_mosaic.version = 11 : i64} {
  func.func @_fourier_kernel(%arg0: i32, %arg1: memref<8x8xf32, #tpu.memory_space<vmem>>, %arg2: memref<8x128xf32, #tpu.memory_space<vmem>>, %arg3: memref<1x128xf32, #tpu.memory_space<vmem>>, %arg4: memref<8x128xf32, #tpu.memory_space<vmem>>) attributes {dimension_semantics = [#tpu.dimension_semantics<parallel>], iteration_bounds = array<i64: 1>, scalar_prefetch = 0 : i64, scratch_operands = 0 : i64, tpu.core_type = #tpu.core_type<tc>, window_params = [{transform_indices = @transform_0, window_bounds = array<i64: 8, 8>}, {pipeline_mode = #tpu.pipeline_mode<synchronous>, transform_indices = @transform_1, window_bounds = array<i64: 8, 128>}, {pipeline_mode = #tpu.pipeline_mode<synchronous>, transform_indices = @transform_2, window_bounds = array<i64: 1, 128>}, {transform_indices = @transform_3, window_bounds = array<i64: 8, 128>}]} {
    %c0 = arith.constant 0 : index
    %c0_0 = arith.constant 0 : index
    %0 = vector.load %arg1[%c0, %c0_0] : memref<8x8xf32, #tpu.memory_space<vmem>>, vector<8x8xf32>
    %c0_1 = arith.constant 0 : index
    %c0_2 = arith.constant 0 : index
    %1 = vector.load %arg2[%c0_1, %c0_2] : memref<8x128xf32, #tpu.memory_space<vmem>>, vector<8x128xf32>
    %cst = arith.constant dense<0.000000e+00> : vector<8x128xf32>
    %2 = tpu.matmul %0, %1, %cst {dimension_numbers = #tpu.dot_dimension_numbers<[1], [0], [0], [1], [0, 0, 1, 1], [], []>, precision = #tpu.contract_precision<fp32>} : vector<8x8xf32>, vector<8x128xf32>, vector<8x128xf32> -> vector<8x128xf32>
    %c0_3 = arith.constant 0 : index
    %c0_4 = arith.constant 0 : index
    %3 = vector.load %arg3[%c0_3, %c0_4] : memref<1x128xf32, #tpu.memory_space<vmem>>, vector<1x128xf32>
    %4 = vector.broadcast %3 : vector<1x128xf32> to vector<8x128xf32>
    %5 = arith.addf %2, %4 : vector<8x128xf32>
    %6 = math.sin %5 : vector<8x128xf32>
    %c0_5 = arith.constant 0 : index
    %c0_6 = arith.constant 0 : index
    %7 = vector.load %arg4[%c0_5, %c0_6] : memref<8x128xf32, #tpu.memory_space<vmem>>, vector<8x128xf32>
    tpu.vector_store %arg4[%c0_5, %c0_6], %6 {strides = array<i32>} : memref<8x128xf32, #tpu.memory_space<vmem>>, vector<8x128xf32>,
    return
  }
  func.func @transform_0(%arg0: i32) -> (i32, i32) {
    %c0_i32 = arith.constant 0 : i32
    %c0_i32_0 = arith.constant 0 : i32
    return %arg0, %c0_i32 : i32, i32
  }
  func.func @transform_1(%arg0: i32) -> (i32, i32) {
    %c0_i32 = arith.constant 0 : i32
    %c0_i32_0 = arith.constant 0 : i32
    %c0_i32_1 = arith.constant 0 : i32
    return %c0_i32, %c0_i32_0 : i32, i32
  }
  func.func @transform_2(%arg0: i32) -> (i32, i32) {
    %c0_i32 = arith.constant 0 : i32
    %c0_i32_0 = arith.constant 0 : i32
    %c0_i32_1 = arith.constant 0 : i32
    return %c0_i32, %c0_i32_0 : i32, i32
  }
  func.func @transform_3(%arg0: i32) -> (i32, i32) {
    %c0_i32 = arith.constant 0 : i32
    %c0_i32_0 = arith.constant 0 : i32
    return %arg0, %c0_i32 : i32, i32
  }
}

</mosaic_0001>

<llo_original>
// kernel: tpu_custom_call.1
$region0: #{tpu_custom_call.1}
  #allocation0 [shape = 'u32[]', space=smem, size = 0x4, offset = 0x4, fixed_abs, tag = 'smem constant byte address 0x4 - core index']
  #allocation1 [shape = 'u32[144,128]{1,0:T(1,128)}', space=vmem, size = 0x12000, scoped, tag = 'internal scratch']
  %s0 = inlined_call_operand.hbm [shape: f32[8,8], index: 0, kind: input, shape index: {}]
  %s1 = inlined_call_operand.hbm [shape: f32[8,128], index: 1, kind: input, shape index: {}]
  %s2 = inlined_call_operand.vmem [shape: f32[1,128], index: 2, kind: input, shape index: {}]
  %s3 = inlined_call_operand.hbm [shape: f32[8,128], index: 3, kind: output, shape index: {}]
  %s4 = sld [smem:[#allocation0]]
  $region30: #{tpu_custom_call.1} parent=0
    _
  %s6 = ssub.s32 1, %s4
  %s7 = scalar_select 0, %s6, %s4
  $region1: #{tpu_custom_call.1} parent=0
    #allocation2 [shape = 'u8[4096]{0}', space=vmem, size = 0x1000, scoped, tag = 'input window, operand 0, single buffered']
    #allocation3 [shape = 's32[1]{0}', space=sflag, size = 0x4, scoped, tag = 'scoped memory for tpu_custom_call.1']
    #allocation4 [shape = 's32[1]{0}', space=sflag, size = 0x4, scoped, tag = 'scoped memory for tpu_custom_call.1']
    #allocation5 [shape = 'u8[4096]{0}', space=vmem, size = 0x1000, scoped, tag = 'input window, operand 1, single buffered']
    #allocation6 [shape = 's32[1]{0}', space=sflag, size = 0x4, scoped, tag = 'scoped memory for tpu_custom_call.1']
    #allocation7 [shape = 'u8[4096]{0}', space=vmem, size = 0x1000, scoped, tag = 'output window, operand 0, single buffered']
    %8 = vsyncpa [#allocation3], 0
    %9 = vsyncpa [#allocation6], 0
    %10 = vsyncpa [#allocation4], 0
    // Predicated region
    $region2: #{tpu_custom_call.1} parent=1 // pred_check
      _
    $region3: #{tpu_custom_call.1} parent=1 // pred_check_branch
      %12 = sbr.rel (0) target = $region5
    $region4: #{tpu_custom_call.1} parent=1 // pred_region
      %s14 = ssub.s32 128, 128
      %15 = vsyncadd [#allocation3], %s14
      %s17 = sshll.u32 [#allocation2], 4
      %s18 = int_to_ptr.vmem [resolvable:$true] %s17
      %20 = dma.hbm_to_vmem [thread:$0]  %s0, 128, %s18, [#allocation3]
    $region5: #{tpu_custom_call.1} parent=1 // pred_fallthru
      _
    // Predicated region
    $region6: #{tpu_custom_call.1} parent=1 // pred_check
      _
    $region7: #{tpu_custom_call.1} parent=1 // pred_check_branch
      %22 = sbr.rel (0) target = $region9
    $region8: #{tpu_custom_call.1} parent=1 // pred_region
      %s24 = ssub.s32 128, 128
      %25 = vsyncadd [#allocation6], %s24
      %s27 = sshll.u32 [#allocation5], 4
      %s28 = int_to_ptr.vmem [resolvable:$true] %s27
      %30 = dma.hbm_to_vmem [thread:$0]  %s1, 128, %s28, [#allocation6]
    $region9: #{tpu_custom_call.1} parent=1 // pred_fallthru
      _
    // Predicated region
    $region10: #{tpu_custom_call.1} parent=1 // pred_check
      _
    $region11: #{tpu_custom_call.1} parent=1 // pred_check_branch
      %32 = sbr.rel (0) target = $region13
    $region12: #{tpu_custom_call.1} parent=1 // pred_region
      _
    $region13: #{tpu_custom_call.1} parent=1 // pred_fallthru
      _
    // Predicated region
    $region14: #{tpu_custom_call.1} parent=1 // pred_check
      _
    $region15: #{tpu_custom_call.1} parent=1 // pred_check_branch
      %34 = sbr.rel (0) target = $region17
    $region16: #{tpu_custom_call.1} parent=1 // pred_region
      %35 = dma.done [#allocation3], 128
    $region17: #{tpu_custom_call.1} parent=1 // pred_fallthru
      _
    // Predicated region
    $region18: #{tpu_custom_call.1} parent=1 // pred_check
      _
    $region19: #{tpu_custom_call.1} parent=1 // pred_check_branch
      %37 = sbr.rel (0) target = $region21
    $region20: #{tpu_custom_call.1} parent=1 // pred_region
      %38 = dma.done [#allocation6], 128
    $region21: #{tpu_custom_call.1} parent=1 // pred_fallthru
      _
    %v39 = vld [vmem:[#allocation2] sm:$0xff]
    %v40 = vld [vmem:[#allocation5] sm:$0xff]
    %v41 = vld [vmem:[%s2] sm:$0x1]
    %v43 = vlaneseq
    %v44 = vshrl.u32 %v43, 7
    %v45 = vsub.s32 0, %v44
    %v46 = vrot.slane %v41, %v45
    %vm48 = vcmask 64512
    %v50 = vsel %vm48, %v39, 0
    %52 = vmatprep.subr.mxu0 0.0
    %53 = vmatpush1.msra.mxu0 0.0
    %54 = vmatprep.subr.mxu0 0.0
    %55 = vmatpush1.msra.mxu0 0.0
    %56 = vmatprep.subr.mxu0 0.0
    %57 = vmatpush1.msra.mxu0 0.0
    %58 = vmatprep.subr.mxu0 0.0
    %59 = vmatpush1.msra.mxu0 0.0
    %60 = vmatprep.subr.mxu0 0.0
    %61 = vmatpush1.msra.mxu0 0.0
    %62 = vmatprep.subr.mxu0 0.0
    %63 = vmatpush1.msra.mxu0 0.0
    %64 = vmatprep.subr.mxu0 0.0
    %65 = vmatpush1.msra.mxu0 0.0
    %66 = vmatprep.subr.mxu0 0.0
    %67 = vmatpush1.msra.mxu0 0.0
    %68 = vmatprep.subr.mxu0 0.0
    %69 = vmatpush1.msra.mxu0 0.0
    %70 = vmatprep.subr.mxu0 0.0
    %71 = vmatpush1.msra.mxu0 0.0
    %72 = vmatprep.subr.mxu0 0.0
    %73 = vmatpush1.msra.mxu0 0.0
    %74 = vmatprep.subr.mxu0 0.0
    %75 = vmatpush1.msra.mxu0 0.0
    %76 = vmatprep.subr.mxu0 0.0
    %77 = vmatpush1.msra.mxu0 0.0
    %78 = vmatprep.subr.mxu0 0.0
    %79 = vmatpush1.msra.mxu0 0.0
    %80 = vmatprep.subr.mxu0 0.0
    %81 = vmatpush1.msra.mxu0 0.0
    %82 = vmatprep.subr.mxu0 0.0
    %v83 = vand.u32 %v40, 4294901760
    %84 = vmatpush1.msra.mxu0 %v83
    %85 = vmatprep.subr.mxu0 0.0
    %86 = vmatpush2.msra.mxu0 0.0
    %87 = vmatprep.subr.mxu0 0.0
    %88 = vmatpush2.msra.mxu0 0.0
    %89 = vmatprep.subr.mxu0 0.0
    %90 = vmatpush2.msra.mxu0 0.0
    %91 = vmatprep.subr.mxu0 0.0
    %92 = vmatpush2.msra.mxu0 0.0
    %93 = vmatprep.subr.mxu0 0.0
    %94 = vmatpush2.msra.mxu0 0.0
    %95 = vmatprep.subr.mxu0 0.0
    %96 = vmatpush2.msra.mxu0 0.0
    %97 = vmatprep.subr.mxu0 0.0
    %98 = vmatpush2.msra.mxu0 0.0
    %99 = vmatprep.subr.mxu0 0.0
    %100 = vmatpush2.msra.mxu0 0.0
    %101 = vmatprep.subr.mxu0 0.0
    %102 = vmatpush2.msra.mxu0 0.0
    %103 = vmatprep.subr.mxu0 0.0
    %104 = vmatpush2.msra.mxu0 0.0
    %105 = vmatprep.subr.mxu0 0.0
    %106 = vmatpush2.msra.mxu0 0.0
    %107 = vmatprep.subr.mxu0 0.0
    %108 = vmatpush2.msra.mxu0 0.0
    %109 = vmatprep.subr.mxu0 0.0
    %110 = vmatpush2.msra.mxu0 0.0
    %111 = vmatprep.subr.mxu0 0.0
    %112 = vmatpush2.msra.mxu0 0.0
    %113 = vmatprep.subr.mxu0 0.0
    %114 = vmatpush2.msra.mxu0 0.0
    %115 = vmatprep.subr.mxu0 0.0
    %116 = vmatpush2.msra.mxu0 0.0
    %117 = vmatprep.mubr.f32.mxu0 0.0
    %v118 = vand.u32 %v50, 4294901760
    %v119 = vsub.f32 %v50, %v118
    %v120 = vand.u32 %v119, 4294901760
    %v121 = vsub.f32 %v119, %v120
    %v122 = vand.u32 %v121, 4294901760
    %123 = vmatmul.mubr.f32.gmra.mxu0 %v122
    %v124 = vpop.f32.mrf.mxu0
    %v125 = vadd.f32 %v46, %v124
    %v126 = vpop.f32.mrf.mxu0
    %127 = vdwg.mxu0
    %128 = vmatprep.subr.mxu0 0.0
    %129 = vmatpush1.msra.mxu0 0.0
    %130 = vmatprep.subr.mxu0 0.0
    %131 = vmatpush1.msra.mxu0 0.0
    %132 = vmatprep.subr.mxu0 0.0
    %133 = vmatpush1.msra.mxu0 0.0
    %134 = vmatprep.subr.mxu0 0.0
    %135 = vmatpush1.msra.mxu0 0.0
    %136 = vmatprep.subr.mxu0 0.0
    %137 = vmatpush1.msra.mxu0 0.0
    %138 = vmatprep.subr.mxu0 0.0
    %139 = vmatpush1.msra.mxu0 0.0
    %140 = vmatprep.subr.mxu0 0.0
    %141 = vmatpush1.msra.mxu0 0.0
    %142 = vmatprep.subr.mxu0 0.0
    %143 = vmatpush1.msra.mxu0 0.0
    %144 = vmatprep.subr.mxu0 0.0
    %145 = vmatpush1.msra.mxu0 0.0
    %146 = vmatprep.subr.mxu0 0.0
    %147 = vmatpush1.msra.mxu0 0.0
    %148 = vmatprep.subr.mxu0 0.0
    %149 = vmatpush1.msra.mxu0 0.0
    %150 = vmatprep.subr.mxu0 0.0
    %151 = vmatpush1.msra.mxu0 0.0
    %152 = vmatprep.subr.mxu0 0.0
    %153 = vmatpush1.msra.mxu0 0.0
    %154 = vmatprep.subr.mxu0 0.0
    %155 = vmatpush1.msra.mxu0 0.0
    %156 = vmatprep.subr.mxu0 0.0
    %157 = vmatpush1.msra.mxu0 0.0
    %158 = vmatprep.subr.mxu0 0.0
    %v159 = vand.u32 %v40, 4294901760
    %v160 = vsub.f32 %v40, %v159
    %v161 = vand.u32 %v160, 4294901760
    %v162 = vsub.f32 %v160, %v161
    %v163 = vand.u32 %v162, 4294901760
    %164 = vmatpush1.msra.mxu0 %v163
    %165 = vmatprep.subr.mxu0 0.0
    %166 = vmatpush2.msra.mxu0 0.0
    %167 = vmatprep.subr.mxu0 0.0
    %168 = vmatpush2.msra.mxu0 0.0
    %169 = vmatprep.subr.mxu0 0.0
    %170 = vmatpush2.msra.mxu0 0.0
    %171 = vmatprep.subr.mxu0 0.0
    %172 = vmatpush2.msra.mxu0 0.0
    %173 = vmatprep.subr.mxu0 0.0
    %174 = vmatpush2.msra.mxu0 0.0
    %175 = vmatprep.subr.mxu0 0.0
    %176 = vmatpush2.msra.mxu0 0.0
    %177 = vmatprep.subr.mxu0 0.0
    %178 = vmatpush2.msra.mxu0 0.0
    %179 = vmatprep.subr.mxu0 0.0
    %180 = vmatpush2.msra.mxu0 0.0
    %181 = vmatprep.subr.mxu0 0.0
    %182 = vmatpush2.msra.mxu0 0.0
    %183 = vmatprep.subr.mxu0 0.0
    %184 = vmatpush2.msra.mxu0 0.0
    %185 = vmatprep.subr.mxu0 0.0
    %186 = vmatpush2.msra.mxu0 0.0
    %187 = vmatprep.subr.mxu0 0.0
    %188 = vmatpush2.msra.mxu0 0.0
    %189 = vmatprep.subr.mxu0 0.0
    %190 = vmatpush2.msra.mxu0 0.0
    %191 = vmatprep.subr.mxu0 0.0
    %192 = vmatpush2.msra.mxu0 0.0
    %193 = vmatprep.subr.mxu0 0.0
    %194 = vmatpush2.msra.mxu0 0.0
    %195 = vmatprep.subr.mxu0 0.0
    %196 = vmatpush2.msra.mxu0 0.0
    %197 = vmatprep.mubr.f32.mxu0 0.0
    %v198 = vand.u32 %v50, 4294901760
    %199 = vmatmul.mubr.f32.gmra.mxu0 %v198
    %v200 = vpop.f32.mrf.mxu0
    %v201 = vadd.f32 %v125, %v200
    %v202 = vpop.f32.mrf.mxu0
    %203 = vdwg.mxu0
    %204 = vmatprep.subr.mxu0 0.0
    %205 = vmatpush1.msra.mxu0 0.0
    %206 = vmatprep.subr.mxu0 0.0
    %207 = vmatpush1.msra.mxu0 0.0
    %208 = vmatprep.subr.mxu0 0.0
    %209 = vmatpush1.msra.mxu0 0.0
    %210 = vmatprep.subr.mxu0 0.0
    %211 = vmatpush1.msra.mxu0 0.0
    %212 = vmatprep.subr.mxu0 0.0
    %213 = vmatpush1.msra.mxu0 0.0
    %214 = vmatprep.subr.mxu0 0.0
    %215 = vmatpush1.msra.mxu0 0.0
    %216 = vmatprep.subr.mxu0 0.0
    %217 = vmatpush1.msra.mxu0 0.0
    %218 = vmatprep.subr.mxu0 0.0
    %219 = vmatpush1.msra.mxu0 0.0
    %220 = vmatprep.subr.mxu0 0.0
    %221 = vmatpush1.msra.mxu0 0.0
    %222 = vmatprep.subr.mxu0 0.0
    %223 = vmatpush1.msra.mxu0 0.0
    %224 = vmatprep.subr.mxu0 0.0
    %225 = vmatpush1.msra.mxu0 0.0
    %226 = vmatprep.subr.mxu0 0.0
    %227 = vmatpush1.msra.mxu0 0.0
    %228 = vmatprep.subr.mxu0 0.0
    %229 = vmatpush1.msra.mxu0 0.0
    %230 = vmatprep.subr.mxu0 0.0
    %231 = vmatpush1.msra.mxu0 0.0
    %232 = vmatprep.subr.mxu0 0.0
    %233 = vmatpush1.msra.mxu0 0.0
    %234 = vmatprep.subr.mxu0 0.0
    %v235 = vand.u32 %v40, 4294901760
    %v236 = vsub.f32 %v40, %v235
    %237 = vmatpush1.msra.mxu0 %v236
    %238 = vmatprep.subr.mxu0 0.0
    %239 = vmatpush2.msra.mxu0 0.0
    %240 = vmatprep.subr.mxu0 0.0
    %241 = vmatpush2.msra.mxu0 0.0
    %242 = vmatprep.subr.mxu0 0.0
    %243 = vmatpush2.msra.mxu0 0.0
    %244 = vmatprep.subr.mxu0 0.0
    %245 = vmatpush2.msra.mxu0 0.0
    %246 = vmatprep.subr.mxu0 0.0
    %247 = vmatpush2.msra.mxu0 0.0
    %248 = vmatprep.subr.mxu0 0.0
    %249 = vmatpush2.msra.mxu0 0.0
    %250 = vmatprep.subr.mxu0 0.0
    %251 = vmatpush2.msra.mxu0 0.0
    %252 = vmatprep.subr.mxu0 0.0
    %253 = vmatpush2.msra.mxu0 0.0
    %254 = vmatprep.subr.mxu0 0.0
    %255 = vmatpush2.msra.mxu0 0.0
    %256 = vmatprep.subr.mxu0 0.0
    %257 = vmatpush2.msra.mxu0 0.0
    %258 = vmatprep.subr.mxu0 0.0
    %259 = vmatpush2.msra.mxu0 0.0
    %260 = vmatprep.subr.mxu0 0.0
    %261 = vmatpush2.msra.mxu0 0.0
    %262 = vmatprep.subr.mxu0 0.0
    %263 = vmatpush2.msra.mxu0 0.0
    %264 = vmatprep.subr.mxu0 0.0
    %265 = vmatpush2.msra.mxu0 0.0
    %266 = vmatprep.subr.mxu0 0.0
    %267 = vmatpush2.msra.mxu0 0.0
    %268 = vmatprep.subr.mxu0 0.0
    %269 = vmatpush2.msra.mxu0 0.0
    %270 = vmatprep.mubr.f32.mxu0 0.0
    %v271 = vand.u32 %v50, 4294901760
    %v272 = vsub.f32 %v50, %v271
    %273 = vmatmul.mubr.f32.gmra.mxu0 %v272
    %v274 = vpop.f32.mrf.mxu0
    %v275 = vadd.f32 %v201, %v274
    %v276 = vpop.f32.mrf.mxu0
    %277 = vdwg.mxu0
    %278 = vmatprep.subr.mxu0 0.0
    %279 = vmatpush1.msra.mxu0 0.0
    %280 = vmatprep.subr.mxu0 0.0
    %281 = vmatpush1.msra.mxu0 0.0
    %282 = vmatprep.subr.mxu0 0.0
    %283 = vmatpush1.msra.mxu0 0.0
    %284 = vmatprep.subr.mxu0 0.0
    %285 = vmatpush1.msra.mxu0 0.0
    %286 = vmatprep.subr.mxu0 0.0
    %287 = vmatpush1.msra.mxu0 0.0
    %288 = vmatprep.subr.mxu0 0.0
    %289 = vmatpush1.msra.mxu0 0.0
    %290 = vmatprep.subr.mxu0 0.0
    %291 = vmatpush1.msra.mxu0 0.0
    %292 = vmatprep.subr.mxu0 0.0
    %293 = vmatpush1.msra.mxu0 0.0
    %294 = vmatprep.subr.mxu0 0.0
    %295 = vmatpush1.msra.mxu0 0.0
    %296 = vmatprep.subr.mxu0 0.0
    %297 = vmatpush1.msra.mxu0 0.0
    %298 = vmatprep.subr.mxu0 0.0
    %299 = vmatpush1.msra.mxu0 0.0
    %300 = vmatprep.subr.mxu0 0.0
    %301 = vmatpush1.msra.mxu0 0.0
    %302 = vmatprep.subr.mxu0 0.0
    %303 = vmatpush1.msra.mxu0 0.0
    %304 = vmatprep.subr.mxu0 0.0
    %305 = vmatpush1.msra.mxu0 0.0
    %306 = vmatprep.subr.mxu0 0.0
    %307 = vmatpush1.msra.mxu0 0.0
    %308 = vmatprep.subr.mxu0 0.0
    %v309 = vand.u32 %v40, 4294901760
    %310 = vmatpush1.msra.mxu0 %v309
    %311 = vmatprep.subr.mxu0 0.0
    %312 = vmatpush2.msra.mxu0 0.0
    %313 = vmatprep.subr.mxu0 0.0
    %314 = vmatpush2.msra.mxu0 0.0
    %315 = vmatprep.subr.mxu0 0.0
    %316 = vmatpush2.msra.mxu0 0.0
    %317 = vmatprep.subr.mxu0 0.0
    %318 = vmatpush2.msra.mxu0 0.0
    %319 = vmatprep.subr.mxu0 0.0
    %320 = vmatpush2.msra.mxu0 0.0
    %321 = vmatprep.subr.mxu0 0.0
    %322 = vmatpush2.msra.mxu0 0.0
    %323 = vmatprep.subr.mxu0 0.0
    %324 = vmatpush2.msra.mxu0 0.0
    %325 = vmatprep.subr.mxu0 0.0
    %326 = vmatpush2.msra.mxu0 0.0
    %327 = vmatprep.subr.mxu0 0.0
    %328 = vmatpush2.msra.mxu0 0.0
    %329 = vmatprep.subr.mxu0 0.0
    %330 = vmatpush2.msra.mxu0 0.0
    %331 = vmatprep.subr.mxu0 0.0
    %332 = vmatpush2.msra.mxu0 0.0
    %333 = vmatprep.subr.mxu0 0.0
    %334 = vmatpush2.msra.mxu0 0.0
    %335 = vmatprep.subr.mxu0 0.0
    %336 = vmatpush2.msra.mxu0 0.0
    %337 = vmatprep.subr.mxu0 0.0
    %338 = vmatpush2.msra.mxu0 0.0
    %339 = vmatprep.subr.mxu0 0.0
    %340 = vmatpush2.msra.mxu0 0.0
    %341 = vmatprep.subr.mxu0 0.0
    %342 = vmatpush2.msra.mxu0 0.0
    %343 = vmatprep.mubr.f32.mxu0 0.0
    %v344 = vand.u32 %v50, 4294901760
    %v345 = vsub.f32 %v50, %v344
    %v346 = vand.u32 %v345, 4294901760
    %347 = vmatmul.mubr.f32.gmra.mxu0 %v346
    %v348 = vpop.f32.mrf.mxu0
    %v349 = vadd.f32 %v275, %v348
    %v350 = vpop.f32.mrf.mxu0
    %351 = vdwg.mxu0
    %352 = vmatprep.subr.mxu0 0.0
    %353 = vmatpush1.msra.mxu0 0.0
    %354 = vmatprep.subr.mxu0 0.0
    %355 = vmatpush1.msra.mxu0 0.0
    %356 = vmatprep.subr.mxu0 0.0
    %357 = vmatpush1.msra.mxu0 0.0
    %358 = vmatprep.subr.mxu0 0.0
    %359 = vmatpush1.msra.mxu0 0.0
    %360 = vmatprep.subr.mxu0 0.0
    %361 = vmatpush1.msra.mxu0 0.0
    %362 = vmatprep.subr.mxu0 0.0
    %363 = vmatpush1.msra.mxu0 0.0
    %364 = vmatprep.subr.mxu0 0.0
    %365 = vmatpush1.msra.mxu0 0.0
    %366 = vmatprep.subr.mxu0 0.0
    %367 = vmatpush1.msra.mxu0 0.0
    %368 = vmatprep.subr.mxu0 0.0
    %369 = vmatpush1.msra.mxu0 0.0
    %370 = vmatprep.subr.mxu0 0.0
    %371 = vmatpush1.msra.mxu0 0.0
    %372 = vmatprep.subr.mxu0 0.0
    %373 = vmatpush1.msra.mxu0 0.0
    %374 = vmatprep.subr.mxu0 0.0
    %375 = vmatpush1.msra.mxu0 0.0
    %376 = vmatprep.subr.mxu0 0.0
    %377 = vmatpush1.msra.mxu0 0.0
    %378 = vmatprep.subr.mxu0 0.0
    %379 = vmatpush1.msra.mxu0 0.0
    %380 = vmatprep.subr.mxu0 0.0
    %381 = vmatpush1.msra.mxu0 0.0
    %382 = vmatprep.subr.mxu0 0.0
    %v383 = vand.u32 %v40, 4294901760
    %v384 = vsub.f32 %v40, %v383
    %v385 = vand.u32 %v384, 4294901760
    %386 = vmatpush1.msra.mxu0 %v385
    %387 = vmatprep.subr.mxu0 0.0
    %388 = vmatpush2.msra.mxu0 0.0
    %389 = vmatprep.subr.mxu0 0.0
    %390 = vmatpush2.msra.mxu0 0.0
    %391 = vmatprep.subr.mxu0 0.0
    %392 = vmatpush2.msra.mxu0 0.0
    %393 = vmatprep.subr.mxu0 0.0
    %394 = vmatpush2.msra.mxu0 0.0
    %395 = vmatprep.subr.mxu0 0.0
    %396 = vmatpush2.msra.mxu0 0.0
    %397 = vmatprep.subr.mxu0 0.0
    %398 = vmatpush2.msra.mxu0 0.0
    %399 = vmatprep.subr.mxu0 0.0
    %400 = vmatpush2.msra.mxu0 0.0
    %401 = vmatprep.subr.mxu0 0.0
    %402 = vmatpush2.msra.mxu0 0.0
    %403 = vmatprep.subr.mxu0 0.0
    %404 = vmatpush2.msra.mxu0 0.0
    %405 = vmatprep.subr.mxu0 0.0
    %406 = vmatpush2.msra.mxu0 0.0
    %407 = vmatprep.subr.mxu0 0.0
    %408 = vmatpush2.msra.mxu0 0.0
    %409 = vmatprep.subr.mxu0 0.0
    %410 = vmatpush2.msra.mxu0 0.0
    %411 = vmatprep.subr.mxu0 0.0
    %412 = vmatpush2.msra.mxu0 0.0
    %413 = vmatprep.subr.mxu0 0.0
    %414 = vmatpush2.msra.mxu0 0.0
    %415 = vmatprep.subr.mxu0 0.0
    %416 = vmatpush2.msra.mxu0 0.0
    %417 = vmatprep.subr.mxu0 0.0
    %418 = vmatpush2.msra.mxu0 0.0
    %419 = vmatprep.mubr.f32.mxu0 0.0
    %v420 = vand.u32 %v50, 4294901760
    %421 = vmatmul.mubr.f32.gmra.mxu0 %v420
    %v422 = vpop.f32.mrf.mxu0
    %v423 = vadd.f32 %v349, %v422
    %v424 = vpop.f32.mrf.mxu0
    %425 = vdwg.mxu0
    %426 = vmatprep.subr.mxu0 0.0
    %427 = vmatpush1.msra.mxu0 0.0
    %428 = vmatprep.subr.mxu0 0.0
    %429 = vmatpush1.msra.mxu0 0.0
    %430 = vmatprep.subr.mxu0 0.0
    %431 = vmatpush1.msra.mxu0 0.0
    %432 = vmatprep.subr.mxu0 0.0
    %433 = vmatpush1.msra.mxu0 0.0
    %434 = vmatprep.subr.mxu0 0.0
    %435 = vmatpush1.msra.mxu0 0.0
    %436 = vmatprep.subr.mxu0 0.0
    %437 = vmatpush1.msra.mxu0 0.0
    %438 = vmatprep.subr.mxu0 0.0
    %439 = vmatpush1.msra.mxu0 0.0
    %440 = vmatprep.subr.mxu0 0.0
    %441 = vmatpush1.msra.mxu0 0.0
    %442 = vmatprep.subr.mxu0 0.0
    %443 = vmatpush1.msra.mxu0 0.0
    %444 = vmatprep.subr.mxu0 0.0
    %445 = vmatpush1.msra.mxu0 0.0
    %446 = vmatprep.subr.mxu0 0.0
    %447 = vmatpush1.msra.mxu0 0.0
    %448 = vmatprep.subr.mxu0 0.0
    %449 = vmatpush1.msra.mxu0 0.0
    %450 = vmatprep.subr.mxu0 0.0
    %451 = vmatpush1.msra.mxu0 0.0
    %452 = vmatprep.subr.mxu0 0.0
    %453 = vmatpush1.msra.mxu0 0.0
    %454 = vmatprep.subr.mxu0 0.0
    %455 = vmatpush1.msra.mxu0 0.0
    %456 = vmatprep.subr.mxu0 0.0
    %v457 = vand.u32 %v40, 4294901760
    %458 = vmatpush1.msra.mxu0 %v457
    %459 = vmatprep.subr.mxu0 0.0
    %460 = vmatpush2.msra.mxu0 0.0
    %461 = vmatprep.subr.mxu0 0.0
    %462 = vmatpush2.msra.mxu0 0.0
    %463 = vmatprep.subr.mxu0 0.0
    %464 = vmatpush2.msra.mxu0 0.0
    %465 = vmatprep.subr.mxu0 0.0
    %466 = vmatpush2.msra.mxu0 0.0
    %467 = vmatprep.subr.mxu0 0.0
    %468 = vmatpush2.msra.mxu0 0.0
    %469 = vmatprep.subr.mxu0 0.0
    %470 = vmatpush2.msra.mxu0 0.0
    %471 = vmatprep.subr.mxu0 0.0
    %472 = vmatpush2.msra.mxu0 0.0
    %473 = vmatprep.subr.mxu0 0.0
    %474 = vmatpush2.msra.mxu0 0.0
    %475 = vmatprep.subr.mxu0 0.0
    %476 = vmatpush2.msra.mxu0 0.0
    %477 = vmatprep.subr.mxu0 0.0
    %478 = vmatpush2.msra.mxu0 0.0
    %479 = vmatprep.subr.mxu0 0.0
    %480 = vmatpush2.msra.mxu0 0.0
    %481 = vmatprep.subr.mxu0 0.0
    %482 = vmatpush2.msra.mxu0 0.0
    %483 = vmatprep.subr.mxu0 0.0
    %484 = vmatpush2.msra.mxu0 0.0
    %485 = vmatprep.subr.mxu0 0.0
    %486 = vmatpush2.msra.mxu0 0.0
    %487 = vmatprep.subr.mxu0 0.0
    %488 = vmatpush2.msra.mxu0 0.0
    %489 = vmatprep.subr.mxu0 0.0
    %490 = vmatpush2.msra.mxu0 0.0
    %491 = vmatprep.mubr.f32.mxu0 0.0
    %v492 = vand.u32 %v50, 4294901760
    %493 = vmatmul.mubr.f32.gmra.mxu0 %v492
    %v494 = vpop.f32.mrf.mxu0
    %v495 = vadd.f32 %v423, %v494
    %v496 = vpop.f32.mrf.mxu0
    %497 = vdwg.mxu0
    %v498 = vand.u32 2147483647, %v495
    %vm499 = vcmp.le.f32.partialorder %v498, 0.7853982
    %vm500 = vcmp.lt.s32.totalorder %v495, 0
    %v501 = vand.u32 %v495, 2139095040
    %v502 = vshrl.u32 %v501, 23
    %v503 = vsub.s32 %v502, 127
    %v504 = vand.u32 2147483647, %v495
    %v505 = vand.u32 %v504, 8388607
    %v506 = vor.u32 %v505, 8388608
    %v507 = vsub.s32 0, %v506
    %v508 = vadd.s32 %v503, 1
    %vm509 = vcmp.gt.s32.totalorder %v508, 0
    %v510 = vsel %vm509, %v508, 0
    %v511 = vshrl.u32 %v510, 5
    %v512 = vand.u32 %v510, 31
    %v513 = vsub.s32 32, %v512
    %v514 = vshrl.u32 683565275, %v513
    %v515 = vshll.u32 683565275, %v512
    %v516 = vshrl.u32 2475754826, %v513
    %v517 = vor.u32 %v515, %v516
    %v518 = vshll.u32 2475754826, %v512
    %v519 = vshrl.u32 2131351028, %v513
    %v520 = vor.u32 %v518, %v519
    %v521 = vshll.u32 2131351028, %v512
    %v522 = vshrl.u32 2102212464, %v513
    %v523 = vor.u32 %v521, %v522
    %v524 = vshll.u32 2102212464, %v512
    %v525 = vshrl.u32 920167782, %v513
    %v526 = vor.u32 %v524, %v525
    %v527 = vshll.u32 920167782, %v512
    %v528 = vshrl.u32 1326507024, %v513
    %v529 = vor.u32 %v527, %v528
    %vm530 = vcmp.lt.s32.totalorder %v511, 1
    %vm531 = vcmp.lt.s32.totalorder %v511, 2
    %vm532 = vcmp.lt.s32.totalorder %v511, 3
    %vm533 = vcmp.lt.s32.totalorder %v511, 4
    %v534 = vsel %vm530, %v514, %v517
    %v535 = vsel %vm533, %v523, 2102212464
    %v536 = vsel %vm532, %v520, %v535
    %v537 = vsel %vm531, %v534, %v536
    %v538 = vsel %vm530, %v517, %v520
    %v539 = vsel %vm533, %v526, 920167782
    %v540 = vsel %vm532, %v523, %v539
    %v541 = vsel %vm531, %v538, %v540
    %v542 = vsel %vm530, %v520, %v523
    %v543 = vsel %vm533, %v529, 1326507024
    %v544 = vsel %vm532, %v526, %v543
    %v545 = vsel %vm531, %v542, %v544
    %v546 = vshll.u32 %v506, 8
    %v547 = vmul.u32.u64.compose %v546, %v545
    %v548 = vextract.low.u32 %v547
    %v549 = vextract.high.u32 %v547
    %v550 = vmul.u32.u64.compose %v546, %v541
    %v551 = vextract.low.u32 %v550
    %v552 = vextract.high.u32 %v550
    %v553 = vmul.u32 %v546, %v537
    %v554 = vadd.s32 %v549, %v551
    %vm555 = vc.u32 %v549, %v551
    %v556 = vadd.s32 %v552, 1
    %v557 = vsel %vm555, %v556, %v552
    %v558 = vadd.s32 %v553, %v557
    %v559 = vadd.s32 %v558, 536870912
    %v560 = vshrl.u32 %v559, 30
    %v561 = vshll.u32 %v560, 30
    %v562 = vsub.s32 %v558, %v561
    %vm563 = vcmp.lt.s32.totalorder %v562, 0
    %v564 = vsub.s32 0, %v562
    %v565 = vsel %vm563, %v564, %v562
    %v566 = vclz %v565
    %v567 = vsub.s32 %v566, 2
    %vm568 = vcmp.gt.s32.totalorder 0, %v567
    %v569 = vsel %vm568, 0, %v567
    %v570 = vsub.s32 32, %v569
    %v571 = vshll.u32 %v562, %v569
    %v572 = vshrl.u32 %v554, %v570
    %v573 = vor.u32 %v571, %v572
    %v574 = vsub.s32 4294967266, %v569
    %v575 = vadd.s32 %v574, 127
    %v576 = vshll.u32 %v575, 23
    %v577 = vor.u32 4788187, %v576
    %v578 = vand.u32 2147483647, %v577
    %v580 = vcvt.s32.f32 %v573
    %v581 = vmul.f32 %v580, %v578
    %v582 = vxor.u32 %v581, 2147483648
    %v583 = vsel %vm500, %v582, %v581
    %v584 = vsub.s32 4, %v560
    %v585 = vsel %vm500, %v584, %v560
    %v586 = vsel %vm499, %v495, %v583
    %v587 = vsel %vm499, 0, %v585
    %v588 = vcosq.f32.pop %v586
    %v589 = vsinq.f32.pop %v586
    %vm590 = vweird.f32 %v495
    %v591 = vadd.s32 %v587, 3
    %v592 = vand.u32 %v591, 3
    %vm593 = vcmp.lt.s32.totalorder %v592, 2
    %vm594 = vcmp.eq.s32.totalorder %v592, 0
    %v595 = vxor.u32 %v589, 2147483648
    %v596 = vsel %vm594, %v588, %v595
    %vm597 = vcmp.eq.s32.totalorder %v592, 2
    %v598 = vxor.u32 %v588, 2147483648
    %v599 = vsel %vm597, %v598, %v589
    %v600 = vsel %vm593, %v596, %v599
    %v601 = vsel %vm590, nan, %v600
    %602 = vst [vmem:[#allocation7] sm:$0xff] %v601
    // Predicated region
    $region22: #{tpu_custom_call.1} parent=1 // pred_check
      _
    $region23: #{tpu_custom_call.1} parent=1 // pred_check_branch
      %604 = sbr.rel (0) target = $region25
    $region24: #{tpu_custom_call.1} parent=1 // pred_region
      %s606 = ssub.s32 128, 128
      %607 = vsyncadd [#allocation4], %s606
      %s609 = sshll.u32 [#allocation7], 4
      %s610 = int_to_ptr.vmem [resolvable:$true] %s609
      %612 = dma.vmem_to_hbm [thread:$0]  %s610, 128, %s3, [#allocation4]
    $region25: #{tpu_custom_call.1} parent=1 // pred_fallthru
      _
    // Predicated region
    $region26: #{tpu_custom_call.1} parent=1 // pred_check
      _
    $region27: #{tpu_custom_call.1} parent=1 // pred_check_branch
      %614 = sbr.rel (0) target = $region29
    $region28: #{tpu_custom_call.1} parent=1 // pred_region
      %615 = dma.done [#allocation4], 128
    $region29: #{tpu_custom_call.1} parent=1 // pred_fallthru
      _
    %616 = vsyncpa [#allocation3], 1
    %617 = vsyncpa [#allocation6], 1
    %618 = vsyncpa [#allocation4], 1

</llo_original>
